<compile_context>
chip_gen: v7x
topology: tpu7x:2x2x1
jax: 0.10.0
libtpu: 0.0.40
codegen_flags: <defaults>
</compile_context>

<pallas_src>
import jax
import jax.numpy as jnp
from jax.experimental import pallas as pl
from jax.experimental.pallas import tpu as pltpu


def fglo_kernel(x_ref, w1_ref, b1_ref, w2_ref, b2_ref, o_ref):
    # x_ref / o_ref block: (1, C, H*W)  -- one sample's channel x spatial slab
    # w1_ref: (mid, C), b1_ref: (mid, 1), w2_ref: (C, mid), b2_ref: (C, 1)
    x = x_ref[0].astype(jnp.float32)                       # (C, HW)
    hw = x.shape[-1]

    # Global average pool: per-channel lane-axis reduction -> (C, 1)
    m = jnp.sum(x, axis=-1, keepdims=True) * (1.0 / hw)

    # FC1 + ReLU: (mid, C) @ (C, 1) -> (mid, 1)
    h = jnp.dot(w1_ref[...], m, preferred_element_type=jnp.float32) + b1_ref[...]
    h = jnp.maximum(h, 0.0)

    # FC2 + Sigmoid: (C, mid) @ (mid, 1) -> (C, 1)
    z = jnp.dot(w2_ref[...], h, preferred_element_type=jnp.float32) + b2_ref[...]
    s = jax.nn.sigmoid(z)

    # Channel-wise rescale of the input (broadcast (C,1) over lanes).
    o_ref[0] = (x * s).astype(o_ref.dtype)


def fglo(x, w1, b1, w2, b2):
    """x: (N, C, H, W); w1: (mid, C); b1: (mid,); w2: (C, mid); b2: (C,)."""
    N, C, H, W = x.shape
    mid = w1.shape[0]
    HW = H * W

    x2 = x.reshape(N, C, HW)           # lane-dense layout plumbing (free)
    b1c = b1.reshape(mid, 1)
    b2c = b2.reshape(C, 1)

    out = pl.pallas_call(
        fglo_kernel,
        out_shape=jax.ShapeDtypeStruct((N, C, HW), x.dtype),
        grid=(N,),
        in_specs=[
            pl.BlockSpec((1, C, HW), lambda n: (n, 0, 0)),   # x slab per sample
            pl.BlockSpec((mid, C), lambda n: (0, 0)),        # W1 (resident)
            pl.BlockSpec((mid, 1), lambda n: (0, 0)),        # b1
            pl.BlockSpec((C, mid), lambda n: (0, 0)),        # W2 (resident)
            pl.BlockSpec((C, 1), lambda n: (0, 0)),          # b2
        ],
        out_specs=pl.BlockSpec((1, C, HW), lambda n: (n, 0, 0)),
        compiler_params=pltpu.CompilerParams(
            dimension_semantics=("parallel",),
        ),
    )(x2, w1, b1c, w2, b2c)
    return out.reshape(N, C, H, W)


def fglo_ref(x, w1, b1, w2, b2):
    xf = x.astype(jnp.float32)
    y = jnp.mean(xf, axis=(2, 3))                           # (N, C)
    h = jnp.maximum(y @ w1.T + b1, 0.0)                     # (N, mid)
    s = jax.nn.sigmoid(h @ w2.T + b2)                       # (N, C)
    return (xf * s[:, :, None, None]).astype(x.dtype)


if __name__ == "__main__":
    key = jax.random.PRNGKey(0)
    kx, k1, k2, k3, k4 = jax.random.split(key, 5)

    # channel=128 with the module's default reduction=16 -> hidden=8
    N, C, H, W = 2, 128, 16, 16
    reduction = 16
    mid = C // reduction

    x = jax.random.normal(kx, (N, C, H, W), dtype=jnp.float32)
    w1 = jax.random.normal(k1, (mid, C), dtype=jnp.float32) * (1.0 / jnp.sqrt(C))
    b1 = 0.1 * jax.random.normal(k2, (mid,), dtype=jnp.float32)
    w2 = jax.random.normal(k3, (C, mid), dtype=jnp.float32) * (1.0 / jnp.sqrt(mid))
    b2 = 0.1 * jax.random.normal(k4, (C,), dtype=jnp.float32)

    out = jax.block_until_ready(fglo(x, w1, b1, w2, b2))

    ref = fglo_ref(x, w1, b1, w2, b2)
    assert jnp.allclose(out, ref, atol=1e-5, rtol=1e-5), (
        f"max abs err {jnp.max(jnp.abs(out - ref))}"
    )
    print("KERNEL_OK")
</pallas_src>

<mosaic_0001>
module attributes {stable_mosaic.version = 11 : i64} {
  func.func @fglo_kernel(%arg0: i32, %arg1: memref<1x128x256xf32, #tpu.memory_space<vmem>>, %arg2: memref<8x128xf32, #tpu.memory_space<vmem>>, %arg3: memref<8x1xf32, #tpu.memory_space<vmem>>, %arg4: memref<128x8xf32, #tpu.memory_space<vmem>>, %arg5: memref<128x1xf32, #tpu.memory_space<vmem>>, %arg6: memref<1x128x256xf32, #tpu.memory_space<vmem>>) attributes {dimension_semantics = [#tpu.dimension_semantics<parallel>], iteration_bounds = array<i64: 2>, scalar_prefetch = 0 : i64, scratch_operands = 0 : i64, tpu.core_type = #tpu.core_type<tc>, window_params = [{transform_indices = @transform_0, window_bounds = array<i64: 1, 128, 256>}, {pipeline_mode = #tpu.pipeline_mode<synchronous>, transform_indices = @transform_1, window_bounds = array<i64: 8, 128>}, {pipeline_mode = #tpu.pipeline_mode<synchronous>, transform_indices = @transform_2, window_bounds = array<i64: 8, 1>}, {pipeline_mode = #tpu.pipeline_mode<synchronous>, transform_indices = @transform_3, window_bounds = array<i64: 128, 8>}, {pipeline_mode = #tpu.pipeline_mode<synchronous>, transform_indices = @transform_4, window_bounds = array<i64: 128, 1>}, {transform_indices = @transform_5, window_bounds = array<i64: 1, 128, 256>}]} {
    %c0 = arith.constant 0 : index
    %c0_0 = arith.constant 0 : index
    %c0_1 = arith.constant 0 : index
    %0 = vector.load %arg1[%c0, %c0_0, %c0_1] : memref<1x128x256xf32, #tpu.memory_space<vmem>>, vector<1x128x256xf32>
    %1 = vector.shape_cast %0 : vector<1x128x256xf32> to vector<128x256xf32>
    %cst = arith.constant dense<0.000000e+00> : vector<128xf32>
    %2 = vector.multi_reduction <add>, %1, %cst [1] : vector<128x256xf32> to vector<128xf32>
    %3 = vector.shape_cast %2 : vector<128xf32> to vector<128x1xf32>
    %cst_2 = arith.constant 3.906250e-03 : f32
    %4 = vector.broadcast %cst_2 : f32 to vector<128x1xf32>
    %5 = arith.mulf %3, %4 : vector<128x1xf32>
    %c0_3 = arith.constant 0 : index
    %c0_4 = arith.constant 0 : index
    %6 = vector.load %arg2[%c0_3, %c0_4] : memref<8x128xf32, #tpu.memory_space<vmem>>, vector<8x128xf32>
    %cst_5 = arith.constant dense<0.000000e+00> : vector<8x1xf32>
    %7 = tpu.matmul %6, %5, %cst_5 {dimension_numbers = #tpu.dot_dimension_numbers<[1], [0], [0], [1], [0, 0, 1, 1], [], []>} : vector<8x128xf32>, vector<128x1xf32>, vector<8x1xf32> -> vector<8x1xf32>
    %c0_6 = arith.constant 0 : index
    %c0_7 = arith.constant 0 : index
    %8 = vector.load %arg3[%c0_6, %c0_7] : memref<8x1xf32, #tpu.memory_space<vmem>>, vector<8x1xf32>
    %9 = arith.addf %7, %8 : vector<8x1xf32>
    %cst_8 = arith.constant 0.000000e+00 : f32
    %10 = vector.broadcast %cst_8 : f32 to vector<8x1xf32>
    %11 = arith.maximumf %9, %10 : vector<8x1xf32>
    %c0_9 = arith.constant 0 : index
    %c0_10 = arith.constant 0 : index
    %12 = vector.load %arg4[%c0_9, %c0_10] : memref<128x8xf32, #tpu.memory_space<vmem>>, vector<128x8xf32>
    %cst_11 = arith.constant dense<0.000000e+00> : vector<128x1xf32>
    %13 = tpu.matmul %12, %11, %cst_11 {dimension_numbers = #tpu.dot_dimension_numbers<[1], [0], [0], [1], [0, 0, 1, 1], [], []>} : vector<128x8xf32>, vector<8x1xf32>, vector<128x1xf32> -> vector<128x1xf32>
    %c0_12 = arith.constant 0 : index
    %c0_13 = arith.constant 0 : index
    %14 = vector.load %arg5[%c0_12, %c0_13] : memref<128x1xf32, #tpu.memory_space<vmem>>, vector<128x1xf32>
    %15 = arith.addf %13, %14 : vector<128x1xf32>
    %16 = arith.negf %15 : vector<128x1xf32>
    %17 = math.exp %16 : vector<128x1xf32>
    %cst_14 = arith.constant 1.000000e+00 : f32
    %18 = vector.broadcast %cst_14 : f32 to vector<128x1xf32>
    %19 = arith.addf %18, %17 : vector<128x1xf32>
    %20 = arith.divf %18, %19 : vector<128x1xf32>
    %21 = vector.broadcast %20 : vector<128x1xf32> to vector<128x256xf32>
    %22 = arith.mulf %1, %21 : vector<128x256xf32>
    %c0_15 = arith.constant 0 : index
    %c0_16 = arith.constant 0 : index
    %c0_17 = arith.constant 0 : index
    %23 = vector.load %arg6[%c0_15, %c0_16, %c0_17] : memref<1x128x256xf32, #tpu.memory_space<vmem>>, vector<1x128x256xf32>
    %24 = vector.shape_cast %23 : vector<1x128x256xf32> to vector<128x256xf32>
    %25 = vector.shape_cast %22 : vector<128x256xf32> to vector<1x128x256xf32>
    tpu.vector_store %arg6[%c0_15, %c0_16, %c0_17], %25 {strides = array<i32>} : memref<1x128x256xf32, #tpu.memory_space<vmem>>, vector<1x128x256xf32>,
    return
  }
  func.func @transform_0(%arg0: i32) -> (i32, i32, i32) {
    %c0_i32 = arith.constant 0 : i32
    %c0_i32_0 = arith.constant 0 : i32
    %c0_i32_1 = arith.constant 0 : i32
    return %arg0, %c0_i32, %c0_i32_0 : i32, i32, i32
  }
  func.func @transform_1(%arg0: i32) -> (i32, i32) {
    %c0_i32 = arith.constant 0 : i32
    %c0_i32_0 = arith.constant 0 : i32
    %c0_i32_1 = arith.constant 0 : i32
    return %c0_i32, %c0_i32_0 : i32, i32
  }
  func.func @transform_2(%arg0: i32) -> (i32, i32) {
    %c0_i32 = arith.constant 0 : i32
    %c0_i32_0 = arith.constant 0 : i32
    %c0_i32_1 = arith.constant 0 : i32
    return %c0_i32, %c0_i32_0 : i32, i32
  }
  func.func @transform_3(%arg0: i32) -> (i32, i32) {
    %c0_i32 = arith.constant 0 : i32
    %c0_i32_0 = arith.constant 0 : i32
    %c0_i32_1 = arith.constant 0 : i32
    return %c0_i32, %c0_i32_0 : i32, i32
  }
  func.func @transform_4(%arg0: i32) -> (i32, i32) {
    %c0_i32 = arith.constant 0 : i32
    %c0_i32_0 = arith.constant 0 : i32
    %c0_i32_1 = arith.constant 0 : i32
    return %c0_i32, %c0_i32_0 : i32, i32
  }
  func.func @transform_5(%arg0: i32) -> (i32, i32, i32) {
    %c0_i32 = arith.constant 0 : i32
    %c0_i32_0 = arith.constant 0 : i32
    %c0_i32_1 = arith.constant 0 : i32
    return %arg0, %c0_i32, %c0_i32_0 : i32, i32, i32
  }
}

</mosaic_0001>

<llo_original>
// kernel: tpu_custom_call.1
$region0: #{tpu_custom_call.1}
  #allocation0 [shape = 'u32[]', space=smem, size = 0x4, offset = 0x4, fixed_abs, tag = 'smem constant byte address 0x4 - core index']
  #allocation1 [shape = 'u32[144,128]{1,0:T(1,128)}', space=vmem, size = 0x12000, scoped, tag = 'internal scratch']
  %s0 = inlined_call_operand.hbm [shape: f32[2,128,256], index: 0, kind: input, shape index: {}]
  %s1 = inlined_call_operand.vmem [shape: f32[8,128], index: 1, kind: input, shape index: {}]
  %s2 = inlined_call_operand.vmem [shape: f32[8,1], index: 2, kind: input, shape index: {}]
  %s3 = inlined_call_operand.vmem [shape: f32[128,8], index: 3, kind: input, shape index: {}]
  %s4 = inlined_call_operand.vmem [shape: f32[128,1], index: 4, kind: input, shape index: {}]
  %s5 = inlined_call_operand.hbm [shape: f32[2,128,256], index: 5, kind: output, shape index: {}]
  %s6 = sld [smem:[#allocation0]]
  $region57: #{tpu_custom_call.1} parent=0
    _
  %s8 = ssub.s32 1, %s6
  %s9 = scalar_select 0, %s8, %s6
  $region1: #{tpu_custom_call.1} parent=0
    #allocation2 [shape = 'u8[262144]{0}', space=vmem, size = 0x40000, scoped, tag = 'input window, operand 0']
    #allocation3 [shape = 's32[2]{0}', space=sflag, size = 0x8, scoped, tag = 'scoped memory for tpu_custom_call.1']
    #allocation4 [shape = 's32[2]{0}', space=sflag, size = 0x8, scoped, tag = 'scoped memory for tpu_custom_call.1']
    #allocation5 [shape = 'u8[262144]{0}', space=vmem, size = 0x40000, scoped, tag = 'output window, operand 0']
    %10 = vsyncpa [#allocation3], 0
    %s11 = scalar_lea.sflag [#allocation3], 1
    %12 = vsyncpa %s11, 0
    %13 = vsyncpa [#allocation4], 0
    %s14 = scalar_lea.sflag [#allocation4], 1
    %15 = vsyncpa %s14, 0
    loop: start=0, step=1, limit=4
    $region2: #{tpu_custom_call.1} parent=1 // loop_pre_header
      _
    $region3: #{tpu_custom_call.1} parent=1 // loop_header
      %s17 = sphi 0, %s21
      %p18 = scmp.ge.s32.totalorder %s17, 4
      %s27 = sphi 0, %s29
      %s30 = sphi 0, %s27
      %s31 = sphi 0, %s30
      %s47 = sphi 0, %s31
      %s51 = sphi 0, %s51
      %s53 = sphi 0, %s51
      %s54 = sphi 0, %s53
      %s68 = sphi 0, %s54
      %s72 = sphi 0, %s72
      %s74 = sphi 0, %s72
      %s75 = sphi 0, %s74
      %s89 = sphi 0, %s75
      %s93 = sphi 0, %s93
      %s95 = sphi 0, %s93
      %s96 = sphi 0, %s95
      %s110 = sphi 0, %s96
      %s114 = sphi 0, %s114
      %s116 = sphi 0, %s114
      %s117 = sphi 0, %s116
      %s131 = sphi 0, %s117
      %s137 = sphi 0, %s139
      %s140 = sphi 0, %s137
      %s141 = sphi 0, %s140
      %s157 = sphi 0, %s141
    $region4: #{tpu_custom_call.1} parent=1 // loop_header_branch
      %20 = sbr.rel (%p18) target = $region8
    $region5: #{tpu_custom_call.1} parent=1 // loop_body
      %s22 = ssub.s32 %s17, 1
      %s23 = ssub.s32 %s17, 2
      %s24 = sadd.s32 %s17, 1
      %s25 = ssub.s32 %s17, %s24
      %p26 = scmp.eq.s32.totalorder %s25, 0
      %s28 = sadd.s32 %s27, 1
      %s29 = scalar_select %p26, %s27, %s28
      %p32 = pneg %p26
      %p33 = scmp.eq.s32.totalorder %s17, 1
      %p34 = por %p32, %p33
      %p35 = scmp.ne.s32.totalorder %s27, %s30
      %p36 = scmp.eq.s32.totalorder %s17, 0
      %p37 = por %p35, %p36
      %p38 = scmp.ne.s32.totalorder %s27, %s30
      %p39 = scmp.eq.s32.totalorder %s22, 1
      %p40 = por %p38, %p39
      %p41 = scmp.ne.s32.totalorder %s30, %s31
      %p42 = scmp.eq.s32.totalorder %s22, 0
      %p43 = por %p41, %p42
      %p44 = scmp.ne.s32.totalorder %s30, %s31
      %p45 = scmp.eq.s32.totalorder %s23, 1
      %p46 = por %p44, %p45
      %p48 = scmp.ne.s32.totalorder %s31, %s47
      %p49 = scmp.eq.s32.totalorder %s23, 0
      %p50 = por %p48, %p49
      %s52 = sadd.s32 %s51, 1
      %p55 = scmp.eq.s32.totalorder %s17, 1
      %p56 = scmp.ne.s32.totalorder %s51, %s53
      %p57 = scmp.eq.s32.totalorder %s17, 0
      %p58 = por %p56, %p57
      %p59 = scmp.ne.s32.totalorder %s51, %s53
      %p60 = scmp.eq.s32.totalorder %s22, 1
      %p61 = por %p59, %p60
      %p62 = scmp.ne.s32.totalorder %s53, %s54
      %p63 = scmp.eq.s32.totalorder %s22, 0
      %p64 = por %p62, %p63
      %p65 = scmp.ne.s32.totalorder %s53, %s54
      %p66 = scmp.eq.s32.totalorder %s23, 1
      %p67 = por %p65, %p66
      %p69 = scmp.ne.s32.totalorder %s54, %s68
      %p70 = scmp.eq.s32.totalorder %s23, 0
      %p71 = por %p69, %p70
      %s73 = sadd.s32 %s72, 1
      %p76 = scmp.eq.s32.totalorder %s17, 1
      %p77 = scmp.ne.s32.totalorder %s72, %s74
      %p78 = scmp.eq.s32.totalorder %s17, 0
      %p79 = por %p77, %p78
      %p80 = scmp.ne.s32.totalorder %s72, %s74
      %p81 = scmp.eq.s32.totalorder %s22, 1
      %p82 = por %p80, %p81
      %p83 = scmp.ne.s32.totalorder %s74, %s75
      %p84 = scmp.eq.s32.totalorder %s22, 0
      %p85 = por %p83, %p84
      %p86 = scmp.ne.s32.totalorder %s74, %s75
      %p87 = scmp.eq.s32.totalorder %s23, 1
      %p88 = por %p86, %p87
      %p90 = scmp.ne.s32.totalorder %s75, %s89
      %p91 = scmp.eq.s32.totalorder %s23, 0
      %p92 = por %p90, %p91
      %s94 = sadd.s32 %s93, 1
      %p97 = scmp.eq.s32.totalorder %s17, 1
      %p98 = scmp.ne.s32.totalorder %s93, %s95
      %p99 = scmp.eq.s32.totalorder %s17, 0
      %p100 = por %p98, %p99
      %p101 = scmp.ne.s32.totalorder %s93, %s95
      %p102 = scmp.eq.s32.totalorder %s22, 1
      %p103 = por %p101, %p102
      %p104 = scmp.ne.s32.totalorder %s95, %s96
      %p105 = scmp.eq.s32.totalorder %s22, 0
      %p106 = por %p104, %p105
      %p107 = scmp.ne.s32.totalorder %s95, %s96
      %p108 = scmp.eq.s32.totalorder %s23, 1
      %p109 = por %p107, %p108
      %p111 = scmp.ne.s32.totalorder %s96, %s110
      %p112 = scmp.eq.s32.totalorder %s23, 0
      %p113 = por %p111, %p112
      %s115 = sadd.s32 %s114, 1
      %p118 = scmp.eq.s32.totalorder %s17, 1
      %p119 = scmp.ne.s32.totalorder %s114, %s116
      %p120 = scmp.eq.s32.totalorder %s17, 0
      %p121 = por %p119, %p120
      %p122 = scmp.ne.s32.totalorder %s114, %s116
      %p123 = scmp.eq.s32.totalorder %s22, 1
      %p124 = por %p122, %p123
      %p125 = scmp.ne.s32.totalorder %s116, %s117
      %p126 = scmp.eq.s32.totalorder %s22, 0
      %p127 = por %p125, %p126
      %p128 = scmp.ne.s32.totalorder %s116, %s117
      %p129 = scmp.eq.s32.totalorder %s23, 1
      %p130 = por %p128, %p129
      %p132 = scmp.ne.s32.totalorder %s117, %s131
      %p133 = scmp.eq.s32.totalorder %s23, 0
      %p134 = por %p132, %p133
      %s135 = ssub.s32 %s17, %s24
      %p136 = scmp.eq.s32.totalorder %s135, 0
      %s138 = sadd.s32 %s137, 1
      %s139 = scalar_select %p136, %s137, %s138
      %p142 = pneg %p136
      %p143 = scmp.eq.s32.totalorder %s17, 1
      %p144 = por %p142, %p143
      %p145 = scmp.ne.s32.totalorder %s137, %s140
      %p146 = scmp.eq.s32.totalorder %s17, 0
      %p147 = por %p145, %p146
      %p148 = scmp.ne.s32.totalorder %s137, %s140
      %p149 = scmp.eq.s32.totalorder %s22, 1
      %p150 = por %p148, %p149
      %p151 = scmp.ne.s32.totalorder %s140, %s141
      %p152 = scmp.eq.s32.totalorder %s22, 0
      %p153 = por %p151, %p152
      %p154 = scmp.ne.s32.totalorder %s140, %s141
      %p155 = scmp.eq.s32.totalorder %s23, 1
      %p156 = por %p154, %p155
      %p158 = scmp.ne.s32.totalorder %s141, %s157
      %p159 = scmp.eq.s32.totalorder %s23, 0
      %p160 = por %p158, %p159
      %p161 = scmp.le.s32.totalorder 1, %s17
      %p162 = scmp.lt.s32.totalorder %s17, 3
      %p163 = pnand %p161, %p162
      %p164 = pneg %p163
      // Predicated region
      $region9: #{tpu_custom_call.1} parent=5 // pred_check
        _
      $region10: #{tpu_custom_call.1} parent=5 // pred_check_branch
        %166 = sbr.rel (%p163) target = $region12
      $region11: #{tpu_custom_call.1} parent=5 // pred_region
        %s167 = ssub.s32 %s17, 1
        // Predicated region
        $region13: #{tpu_custom_call.1} parent=11 // pred_check
          %p168 = pneg %p64
        $region14: #{tpu_custom_call.1} parent=11 // pred_check_branch
          %170 = sbr.rel (%p168) target = $region16
        $region15: #{tpu_custom_call.1} parent=11 // pred_region
          _
        $region16: #{tpu_custom_call.1} parent=11 // pred_fallthru
          _
        // Predicated region
        $region17: #{tpu_custom_call.1} parent=11 // pred_check
          %p171 = pneg %p85
        $region18: #{tpu_custom_call.1} parent=11 // pred_check_branch
          %173 = sbr.rel (%p171) target = $region20
        $region19: #{tpu_custom_call.1} parent=11 // pred_region
          _
        $region20: #{tpu_custom_call.1} parent=11 // pred_fallthru
          _
        // Predicated region
        $region21: #{tpu_custom_call.1} parent=11 // pred_check
          %p174 = pneg %p106
        $region22: #{tpu_custom_call.1} parent=11 // pred_check_branch
          %176 = sbr.rel (%p174) target = $region24
        $region23: #{tpu_custom_call.1} parent=11 // pred_region
          _
        $region24: #{tpu_custom_call.1} parent=11 // pred_fallthru
          _
        // Predicated region
        $region25: #{tpu_custom_call.1} parent=11 // pred_check
          %p177 = pneg %p127
        $region26: #{tpu_custom_call.1} parent=11 // pred_check_branch
          %179 = sbr.rel (%p177) target = $region28
        $region27: #{tpu_custom_call.1} parent=11 // pred_region
          _
        $region28: #{tpu_custom_call.1} parent=11 // pred_fallthru
          _
      $region12: #{tpu_custom_call.1} parent=5 // pred_fallthru
        _
      %p180 = scmp.lt.s32.totalorder %s17, 2
      // Predicated region
      $region29: #{tpu_custom_call.1} parent=5 // pred_check
        %p181 = pneg %p180
      $region30: #{tpu_custom_call.1} parent=5 // pred_check_branch
        %183 = sbr.rel (%p181) target = $region32
      $region31: #{tpu_custom_call.1} parent=5 // pred_region
        // Predicated region
        $region33: #{tpu_custom_call.1} parent=31 // pred_check
          %p184 = pneg %p37
        $region34: #{tpu_custom_call.1} parent=31 // pred_check_branch
          %186 = sbr.rel (%p184) target = $region36
        $region35: #{tpu_custom_call.1} parent=31 // pred_region
          %s187 = sand.u32 %s27, 1
          %s188 = scalar_lea.sflag [#allocation3], %s187
          %s189 = sand.u32 %s27, 1
          %s190 = smul.addr %s189, 256
          %s191 = scalar_lea.vmem [#allocation2], %s190
          %s193 = ssub.s32 4096, 4096
          %194 = vsyncadd %s188, %s193
          %s195 = smul.addr %s17, 32
          %s196 = smul.addr %s195, 128
          %s197 = scalar_lea.hbm %s0, %s196
          %s198 = sshll.u32 %s191, 4
          %s199 = int_to_ptr.vmem [resolvable:$true] %s198
          %204 = dma.hbm_to_vmem [thread:$0]  %s197, 4096, %s199, %s188, 256, 256, 16
        $region36: #{tpu_custom_call.1} parent=31 // pred_fallthru
          _
      $region32: #{tpu_custom_call.1} parent=5 // pred_fallthru
        _
      %p205 = scmp.le.s32.totalorder 1, %s17
      %p206 = scmp.lt.s32.totalorder %s17, 3
      %p207 = pnand %p205, %p206
      %p208 = pneg %p207
      // Predicated region
      $region37: #{tpu_custom_call.1} parent=5 // pred_check
        _
      $region38: #{tpu_custom_call.1} parent=5 // pred_check_branch
        %210 = sbr.rel (%p207) target = $region40
      $region39: #{tpu_custom_call.1} parent=5 // pred_region
        %s211 = ssub.s32 %s17, 1
        %s212 = sand.u32 %s30, 1
        %s213 = scalar_lea.sflag [#allocation3], %s212
        %s214 = sand.u32 %s30, 1
        %s215 = smul.addr %s214, 256
        %s216 = scalar_lea.vmem [#allocation2], %s215
        // Predicated region
        $region41: #{tpu_custom_call.1} parent=39 // pred_check
          %p217 = pneg %p43
        $region42: #{tpu_custom_call.1} parent=39 // pred_check_branch
          %219 = sbr.rel (%p217) target = $region44
        $region43: #{tpu_custom_call.1} parent=39 // pred_region
          %220 = dma.done %s213, 4096
        $region44: #{tpu_custom_call.1} parent=39 // pred_fallthru
          _
        %s221 = sand.u32 %s30, 1
        %s222 = scalar_lea.sflag [#allocation3], %s221
        %s223 = sand.u32 %s30, 1
        %s224 = smul.addr %s223, 256
        %s225 = scalar_lea.vmem [#allocation2], %s224
        %p226 = pneg %p43
        %p227 = pneg %p40
        %p228 = pneg %p64
        %p229 = pneg %p61
        %p230 = pneg %p85
        %p231 = pneg %p82
        %p232 = pneg %p106
        %p233 = pneg %p103
        %p234 = pneg %p127
        %p235 = pneg %p124
        %p236 = pneg %p153
        %p237 = pneg %p150
        %s238 = sand.u32 %s140, 1
        %s239 = scalar_lea.sflag [#allocation4], %s238
        %s240 = sand.u32 %s140, 1
        %s241 = smul.addr %s240, 256
        %s242 = scalar_lea.vmem [#allocation5], %s241
        %v243 = vld [vmem:[%s216] sm:$0xff]
        %v244 = vld [vmem:[%s216 + $0x8] sm:$0xff]
        %v245 = vld [vmem:[%s216 + $0x10] sm:$0xff]
        %v246 = vld [vmem:[%s216 + $0x18] sm:$0xff]
        %v247 = vld [vmem:[%s216 + $0x20] sm:$0xff]
        %v248 = vld [vmem:[%s216 + $0x28] sm:$0xff]
        %v249 = vld [vmem:[%s216 + $0x30] sm:$0xff]
        %v250 = vld [vmem:[%s216 + $0x38] sm:$0xff]
        %v251 = vld [vmem:[%s216 + $0x40] sm:$0xff]
        %v252 = vld [vmem:[%s216 + $0x48] sm:$0xff]
        %v253 = vld [vmem:[%s216 + $0x50] sm:$0xff]
        %v254 = vld [vmem:[%s216 + $0x58] sm:$0xff]
        %v255 = vld [vmem:[%s216 + $0x60] sm:$0xff]
        %v256 = vld [vmem:[%s216 + $0x68] sm:$0xff]
        %v257 = vld [vmem:[%s216 + $0x70] sm:$0xff]
        %v258 = vld [vmem:[%s216 + $0x78] sm:$0xff]
        %v259 = vld [vmem:[%s216 + $0x80] sm:$0xff]
        %v260 = vld [vmem:[%s216 + $0x88] sm:$0xff]
        %v261 = vld [vmem:[%s216 + $0x90] sm:$0xff]
        %v262 = vld [vmem:[%s216 + $0x98] sm:$0xff]
        %v263 = vld [vmem:[%s216 + $0xa0] sm:$0xff]
        %v264 = vld [vmem:[%s216 + $0xa8] sm:$0xff]
        %v265 = vld [vmem:[%s216 + $0xb0] sm:$0xff]
        %v266 = vld [vmem:[%s216 + $0xb8] sm:$0xff]
        %v267 = vld [vmem:[%s216 + $0xc0] sm:$0xff]
        %v268 = vld [vmem:[%s216 + $0xc8] sm:$0xff]
        %v269 = vld [vmem:[%s216 + $0xd0] sm:$0xff]
        %v270 = vld [vmem:[%s216 + $0xd8] sm:$0xff]
        %v271 = vld [vmem:[%s216 + $0xe0] sm:$0xff]
        %v272 = vld [vmem:[%s216 + $0xe8] sm:$0xff]
        %v273 = vld [vmem:[%s216 + $0xf0] sm:$0xff]
        %v274 = vld [vmem:[%s216 + $0xf8] sm:$0xff]
        %v275 = vadd.f32 %v243, %v244
        %276 = vadd.xlane.f32.xlu0 %v275
        %v277 = vpop.xlane.xlu0 %276
        %v278 = vadd.f32 %v245, %v246
        %279 = vadd.xlane.f32.xlu0 %v278
        %v280 = vpop.xlane.xlu0 %279
        %v281 = vadd.f32 %v247, %v248
        %282 = vadd.xlane.f32.xlu0 %v281
        %v283 = vpop.xlane.xlu0 %282
        %v284 = vadd.f32 %v249, %v250
        %285 = vadd.xlane.f32.xlu0 %v284
        %v286 = vpop.xlane.xlu0 %285
        %v287 = vadd.f32 %v251, %v252
        %288 = vadd.xlane.f32.xlu0 %v287
        %v289 = vpop.xlane.xlu0 %288
        %v290 = vadd.f32 %v253, %v254
        %291 = vadd.xlane.f32.xlu0 %v290
        %v292 = vpop.xlane.xlu0 %291
        %v293 = vadd.f32 %v255, %v256
        %294 = vadd.xlane.f32.xlu0 %v293
        %v295 = vpop.xlane.xlu0 %294
        %v296 = vadd.f32 %v257, %v258
        %297 = vadd.xlane.f32.xlu0 %v296
        %v298 = vpop.xlane.xlu0 %297
        %v299 = vadd.f32 %v259, %v260
        %300 = vadd.xlane.f32.xlu0 %v299
        %v301 = vpop.xlane.xlu0 %300
        %v302 = vadd.f32 %v261, %v262
        %303 = vadd.xlane.f32.xlu0 %v302
        %v304 = vpop.xlane.xlu0 %303
        %v305 = vadd.f32 %v263, %v264
        %306 = vadd.xlane.f32.xlu0 %v305
        %v307 = vpop.xlane.xlu0 %306
        %v308 = vadd.f32 %v265, %v266
        %309 = vadd.xlane.f32.xlu0 %v308
        %v310 = vpop.xlane.xlu0 %309
        %v311 = vadd.f32 %v267, %v268
        %312 = vadd.xlane.f32.xlu0 %v311
        %v313 = vpop.xlane.xlu0 %312
        %v314 = vadd.f32 %v269, %v270
        %315 = vadd.xlane.f32.xlu0 %v314
        %v316 = vpop.xlane.xlu0 %315
        %v317 = vadd.f32 %v271, %v272
        %318 = vadd.xlane.f32.xlu0 %v317
        %v319 = vpop.xlane.xlu0 %318
        %v320 = vadd.f32 %v273, %v274
        %321 = vadd.xlane.f32.xlu0 %v320
        %v322 = vpop.xlane.xlu0 %321
        %v323 = vmul.f32 %v277, 0.00390625
        %v324 = vmul.f32 %v280, 0.00390625
        %v325 = vmul.f32 %v283, 0.00390625
        %v326 = vmul.f32 %v286, 0.00390625
        %v327 = vmul.f32 %v289, 0.00390625
        %v328 = vmul.f32 %v292, 0.00390625
        %v329 = vmul.f32 %v295, 0.00390625
        %v330 = vmul.f32 %v298, 0.00390625
        %v331 = vmul.f32 %v301, 0.00390625
        %v332 = vmul.f32 %v304, 0.00390625
        %v333 = vmul.f32 %v307, 0.00390625
        %v334 = vmul.f32 %v310, 0.00390625
        %v335 = vmul.f32 %v313, 0.00390625
        %v336 = vmul.f32 %v316, 0.00390625
        %v337 = vmul.f32 %v319, 0.00390625
        %v338 = vmul.f32 %v322, 0.00390625
        %v339 = vld [vmem:[%s1] sm:$0xff]
        %v340 = vld [vmem:[%s2] sm:$0xff]
        %341 = vmatprep.subr.mxu0 0.0
        %342 = vmatpush1.msra.mxu0 %v323
        %343 = vmatprep.subr.mxu0 0.0
        %344 = vmatpush1.msra.mxu0 %v324
        %345 = vmatprep.subr.mxu0 0.0
        %346 = vmatpush1.msra.mxu0 %v325
        %347 = vmatprep.subr.mxu0 0.0
        %348 = vmatpush1.msra.mxu0 %v326
        %349 = vmatprep.subr.mxu0 0.0
        %350 = vmatpush1.msra.mxu0 %v327
        %351 = vmatprep.subr.mxu0 0.0
        %352 = vmatpush1.msra.mxu0 %v328
        %353 = vmatprep.subr.mxu0 0.0
        %354 = vmatpush1.msra.mxu0 %v329
        %355 = vmatprep.subr.mxu0 0.0
        %356 = vmatpush1.msra.mxu0 %v330
        %357 = vmatprep.subr.mxu0 0.0
        %358 = vmatpush1.msra.mxu0 %v331
        %359 = vmatprep.subr.mxu0 0.0
        %360 = vmatpush1.msra.mxu0 %v332
        %361 = vmatprep.subr.mxu0 0.0
        %362 = vmatpush1.msra.mxu0 %v333
        %363 = vmatprep.subr.mxu0 0.0
        %364 = vmatpush1.msra.mxu0 %v334
        %365 = vmatprep.subr.mxu0 0.0
        %366 = vmatpush1.msra.mxu0 %v335
        %367 = vmatprep.subr.mxu0 0.0
        %368 = vmatpush1.msra.mxu0 %v336
        %369 = vmatprep.subr.mxu0 0.0
        %370 = vmatpush1.msra.mxu0 %v337
        %371 = vmatprep.subr.mxu0 0.0
        %372 = vmatpush1.msra.mxu0 %v338
        %373 = vmatprep.subr.mxu0 0.0
        %374 = vmatpush1.msra.mxu0 0.0
        %375 = vmatprep.subr.mxu0 0.0
        %376 = vmatpush1.msra.mxu0 0.0
        %377 = vmatprep.subr.mxu0 0.0
        %378 = vmatpush1.msra.mxu0 0.0
        %379 = vmatprep.subr.mxu0 0.0
        %380 = vmatpush1.msra.mxu0 0.0
        %381 = vmatprep.subr.mxu0 0.0
        %382 = vmatpush1.msra.mxu0 0.0
        %383 = vmatprep.subr.mxu0 0.0
        %384 = vmatpush1.msra.mxu0 0.0
        %385 = vmatprep.subr.mxu0 0.0
        %386 = vmatpush1.msra.mxu0 0.0
        %387 = vmatprep.subr.mxu0 0.0
        %388 = vmatpush1.msra.mxu0 0.0
        %389 = vmatprep.subr.mxu0 0.0
        %390 = vmatpush1.msra.mxu0 0.0
        %391 = vmatprep.subr.mxu0 0.0
        %392 = vmatpush1.msra.mxu0 0.0
        %393 = vmatprep.subr.mxu0 0.0
        %394 = vmatpush1.msra.mxu0 0.0
        %395 = vmatprep.subr.mxu0 0.0
        %396 = vmatpush1.msra.mxu0 0.0
        %397 = vmatprep.subr.mxu0 0.0
        %398 = vmatpush1.msra.mxu0 0.0
        %399 = vmatprep.subr.mxu0 0.0
        %400 = vmatpush1.msra.mxu0 0.0
        %401 = vmatprep.subr.mxu0 0.0
        %402 = vmatpush1.msra.mxu0 0.0
        %403 = vmatprep.subr.mxu0 0.0
        %404 = vmatpush1.msra.mxu0 0.0
        %405 = vmatprep.mubr.f32.mxu0 0.0
        %406 = vmatmul.mubr.f32.gmra.mrb[0].mxu0 %v339
        %v407 = vpop.f32.mrb[0].mxu0
        %v408 = vadd.f32 %v340, %v407
        %v409 = vpop.f32.mrb[0].mxu0
        %410 = vdwg.mxu0
        %v411 = vmax.f32 %v408, 0.0
        %v412 = vld [vmem:[%s3] sm:$0xff]
        %v413 = vld [vmem:[%s3 + $0x8] sm:$0xff]
        %v414 = vld [vmem:[%s3 + $0x10] sm:$0xff]
        %v415 = vld [vmem:[%s3 + $0x18] sm:$0xff]
        %v416 = vld [vmem:[%s3 + $0x20] sm:$0xff]
        %v417 = vld [vmem:[%s3 + $0x28] sm:$0xff]
        %v418 = vld [vmem:[%s3 + $0x30] sm:$0xff]
        %v419 = vld [vmem:[%s3 + $0x38] sm:$0xff]
        %v420 = vld [vmem:[%s3 + $0x40] sm:$0xff]
        %v421 = vld [vmem:[%s3 + $0x48] sm:$0xff]
        %v422 = vld [vmem:[%s3 + $0x50] sm:$0xff]
        %v423 = vld [vmem:[%s3 + $0x58] sm:$0xff]
        %v424 = vld [vmem:[%s3 + $0x60] sm:$0xff]
        %v425 = vld [vmem:[%s3 + $0x68] sm:$0xff]
        %v426 = vld [vmem:[%s3 + $0x70] sm:$0xff]
        %v427 = vld [vmem:[%s3 + $0x78] sm:$0xff]
        %v428 = vld [vmem:[%s4] sm:$0xff]
        %v429 = vld [vmem:[%s4 + $0x8] sm:$0xff]
        %v430 = vld [vmem:[%s4 + $0x10] sm:$0xff]
        %v431 = vld [vmem:[%s4 + $0x18] sm:$0xff]
        %v432 = vld [vmem:[%s4 + $0x20] sm:$0xff]
        %v433 = vld [vmem:[%s4 + $0x28] sm:$0xff]
        %v434 = vld [vmem:[%s4 + $0x30] sm:$0xff]
        %v435 = vld [vmem:[%s4 + $0x38] sm:$0xff]
        %v436 = vld [vmem:[%s4 + $0x40] sm:$0xff]
        %v437 = vld [vmem:[%s4 + $0x48] sm:$0xff]
        %v438 = vld [vmem:[%s4 + $0x50] sm:$0xff]
        %v439 = vld [vmem:[%s4 + $0x58] sm:$0xff]
        %v440 = vld [vmem:[%s4 + $0x60] sm:$0xff]
        %v441 = vld [vmem:[%s4 + $0x68] sm:$0xff]
        %v442 = vld [vmem:[%s4 + $0x70] sm:$0xff]
        %v443 = vld [vmem:[%s4 + $0x78] sm:$0xff]
        %vm444 = vcmask 64512
        %v446 = vsel %vm444, %v412, 0
        %v449 = vsel %vm444, %v413, 0
        %v452 = vsel %vm444, %v414, 0
        %v455 = vsel %vm444, %v415, 0
        %v458 = vsel %vm444, %v416, 0
        %v461 = vsel %vm444, %v417, 0
        %v464 = vsel %vm444, %v418, 0
        %v467 = vsel %vm444, %v419, 0
        %v470 = vsel %vm444, %v420, 0
        %v473 = vsel %vm444, %v421, 0
        %v476 = vsel %vm444, %v422, 0
        %v479 = vsel %vm444, %v423, 0
        %v482 = vsel %vm444, %v424, 0
        %v485 = vsel %vm444, %v425, 0
        %v488 = vsel %vm444, %v426, 0
        %v491 = vsel %vm444, %v427, 0
        %493 = vmatprep.subr.mxu0 0.0
        %494 = vmatpush1.msra.mxu0 %v411
        %495 = vmatprep.subr.mxu0 0.0
        %496 = vmatpush1.msra.mxu0 0.0
        %497 = vmatprep.subr.mxu0 0.0
        %498 = vmatpush1.msra.mxu0 0.0
        %499 = vmatprep.subr.mxu0 0.0
        %500 = vmatpush1.msra.mxu0 0.0
        %501 = vmatprep.subr.mxu0 0.0
        %502 = vmatpush1.msra.mxu0 0.0
        %503 = vmatprep.subr.mxu0 0.0
        %504 = vmatpush1.msra.mxu0 0.0
        %505 = vmatprep.subr.mxu0 0.0
        %506 = vmatpush1.msra.mxu0 0.0
        %507 = vmatprep.subr.mxu0 0.0
        %508 = vmatpush1.msra.mxu0 0.0
        %509 = vmatprep.subr.mxu0 0.0
        %510 = vmatpush1.msra.mxu0 0.0
        %511 = vmatprep.subr.mxu0 0.0
        %512 = vmatpush1.msra.mxu0 0.0
        %513 = vmatprep.subr.mxu0 0.0
        %514 = vmatpush1.msra.mxu0 0.0
        %515 = vmatprep.subr.mxu0 0.0
        %516 = vmatpush1.msra.mxu0 0.0
        %517 = vmatprep.subr.mxu0 0.0
        %518 = vmatpush1.msra.mxu0 0.0
        %519 = vmatprep.subr.mxu0 0.0
        %520 = vmatpush1.msra.mxu0 0.0
        %521 = vmatprep.subr.mxu0 0.0
        %522 = vmatpush1.msra.mxu0 0.0
        %523 = vmatprep.subr.mxu0 0.0
        %524 = vmatpush1.msra.mxu0 0.0
        %525 = vmatprep.subr.mxu0 0.0
        %526 = vmatpush1.msra.mxu0 0.0
        %527 = vmatprep.subr.mxu0 0.0
        %528 = vmatpush1.msra.mxu0 0.0
        %529 = vmatprep.subr.mxu0 0.0
        %530 = vmatpush1.msra.mxu0 0.0
        %531 = vmatprep.subr.mxu0 0.0
        %532 = vmatpush1.msra.mxu0 0.0
        %533 = vmatprep.subr.mxu0 0.0
        %534 = vmatpush1.msra.mxu0 0.0
        %535 = vmatprep.subr.mxu0 0.0
        %536 = vmatpush1.msra.mxu0 0.0
        %537 = vmatprep.subr.mxu0 0.0
        %538 = vmatpush1.msra.mxu0 0.0
        %539 = vmatprep.subr.mxu0 0.0
        %540 = vmatpush1.msra.mxu0 0.0
        %541 = vmatprep.subr.mxu0 0.0
        %542 = vmatpush1.msra.mxu0 0.0
        %543 = vmatprep.subr.mxu0 0.0
        %544 = vmatpush1.msra.mxu0 0.0
        %545 = vmatprep.subr.mxu0 0.0
        %546 = vmatpush1.msra.mxu0 0.0
        %547 = vmatprep.subr.mxu0 0.0
        %548 = vmatpush1.msra.mxu0 0.0
        %549 = vmatprep.subr.mxu0 0.0
        %550 = vmatpush1.msra.mxu0 0.0
        %551 = vmatprep.subr.mxu0 0.0
        %552 = vmatpush1.msra.mxu0 0.0
        %553 = vmatprep.subr.mxu0 0.0
        %554 = vmatpush1.msra.mxu0 0.0
        %555 = vmatprep.subr.mxu0 0.0
        %556 = vmatpush1.msra.mxu0 0.0
        %557 = vmatprep.mubr.f32.mxu0 0.0
        %558 = vmatmul.mubr.f32.gmra.mrb[0].mxu0 %v446
        %v559 = vpop.f32.mrb[0].mxu0
        %v560 = vadd.f32 %v428, %v559
        %v561 = vpop.f32.mrb[0].mxu0
        %562 = vmatprep.mubr.f32.mxu0 0.0
        %563 = vmatmul.mubr.f32.gmra.mrb[0].mxu0 %v449
        %v564 = vpop.f32.mrb[0].mxu0
        %v565 = vadd.f32 %v429, %v564
        %v566 = vpop.f32.mrb[0].mxu0
        %567 = vmatprep.mubr.f32.mxu0 0.0
        %568 = vmatmul.mubr.f32.gmra.mrb[0].mxu0 %v452
        %v569 = vpop.f32.mrb[0].mxu0
        %v570 = vadd.f32 %v430, %v569
        %v571 = vpop.f32.mrb[0].mxu0
        %572 = vmatprep.mubr.f32.mxu0 0.0
        %573 = vmatmul.mubr.f32.gmra.mrb[0].mxu0 %v455
        %v574 = vpop.f32.mrb[0].mxu0
        %v575 = vadd.f32 %v431, %v574
        %v576 = vpop.f32.mrb[0].mxu0
        %577 = vmatprep.mubr.f32.mxu0 0.0
        %578 = vmatmul.mubr.f32.gmra.mrb[0].mxu0 %v458
        %v579 = vpop.f32.mrb[0].mxu0
        %v580 = vadd.f32 %v432, %v579
        %v581 = vpop.f32.mrb[0].mxu0
        %582 = vmatprep.mubr.f32.mxu0 0.0
        %583 = vmatmul.mubr.f32.gmra.mrb[0].mxu0 %v461
        %v584 = vpop.f32.mrb[0].mxu0
        %v585 = vadd.f32 %v433, %v584
        %v586 = vpop.f32.mrb[0].mxu0
        %587 = vmatprep.mubr.f32.mxu0 0.0
        %588 = vmatmul.mubr.f32.gmra.mrb[0].mxu0 %v464
        %v589 = vpop.f32.mrb[0].mxu0
        %v590 = vadd.f32 %v434, %v589
        %v591 = vpop.f32.mrb[0].mxu0
        %592 = vmatprep.mubr.f32.mxu0 0.0
        %593 = vmatmul.mubr.f32.gmra.mrb[0].mxu0 %v467
        %v594 = vpop.f32.mrb[0].mxu0
        %v595 = vadd.f32 %v435, %v594
        %v596 = vpop.f32.mrb[0].mxu0
        %597 = vmatprep.mubr.f32.mxu0 0.0
        %598 = vmatmul.mubr.f32.gmra.mrb[0].mxu0 %v470
        %v599 = vpop.f32.mrb[0].mxu0
        %v600 = vadd.f32 %v436, %v599
        %v601 = vpop.f32.mrb[0].mxu0
        %602 = vmatprep.mubr.f32.mxu0 0.0
        %603 = vmatmul.mubr.f32.gmra.mrb[0].mxu0 %v473
        %v604 = vpop.f32.mrb[0].mxu0
        %v605 = vadd.f32 %v437, %v604
        %v606 = vpop.f32.mrb[0].mxu0
        %607 = vmatprep.mubr.f32.mxu0 0.0
        %608 = vmatmul.mubr.f32.gmra.mrb[0].mxu0 %v476
        %v609 = vpop.f32.mrb[0].mxu0
        %v610 = vadd.f32 %v438, %v609
        %v611 = vpop.f32.mrb[0].mxu0
        %612 = vmatprep.mubr.f32.mxu0 0.0
        %613 = vmatmul.mubr.f32.gmra.mrb[0].mxu0 %v479
        %v614 = vpop.f32.mrb[0].mxu0
        %v615 = vadd.f32 %v439, %v614
        %v616 = vpop.f32.mrb[0].mxu0
        %617 = vmatprep.mubr.f32.mxu0 0.0
        %618 = vmatmul.mubr.f32.gmra.mrb[0].mxu0 %v482
        %v619 = vpop.f32.mrb[0].mxu0
        %v620 = vadd.f32 %v440, %v619
        %v621 = vpop.f32.mrb[0].mxu0
        %622 = vmatprep.mubr.f32.mxu0 0.0
        %623 = vmatmul.mubr.f32.gmra.mrb[0].mxu0 %v485
        %v624 = vpop.f32.mrb[0].mxu0
        %v625 = vadd.f32 %v441, %v624
        %v626 = vpop.f32.mrb[0].mxu0
        %627 = vmatprep.mubr.f32.mxu0 0.0
        %628 = vmatmul.mubr.f32.gmra.mrb[0].mxu0 %v488
        %v629 = vpop.f32.mrb[0].mxu0
        %v630 = vadd.f32 %v442, %v629
        %v631 = vpop.f32.mrb[0].mxu0
        %632 = vmatprep.mubr.f32.mxu0 0.0
        %633 = vmatmul.mubr.f32.gmra.mrb[0].mxu0 %v491
        %v634 = vpop.f32.mrb[0].mxu0
        %v635 = vadd.f32 %v443, %v634
        %v636 = vpop.f32.mrb[0].mxu0
        %637 = vdwg.mxu0
        %v638 = vxor.u32 %v560, 2147483648
        %v639 = vxor.u32 %v565, 2147483648
        %v640 = vxor.u32 %v570, 2147483648
        %v641 = vxor.u32 %v575, 2147483648
        %v642 = vxor.u32 %v580, 2147483648
        %v643 = vxor.u32 %v585, 2147483648
        %v644 = vxor.u32 %v590, 2147483648
        %v645 = vxor.u32 %v595, 2147483648
        %v646 = vxor.u32 %v600, 2147483648
        %v647 = vxor.u32 %v605, 2147483648
        %v648 = vxor.u32 %v610, 2147483648
        %v649 = vxor.u32 %v615, 2147483648
        %v650 = vxor.u32 %v620, 2147483648
        %v651 = vxor.u32 %v625, 2147483648
        %v652 = vxor.u32 %v630, 2147483648
        %v653 = vxor.u32 %v635, 2147483648
        %v654 = vmul.f32 %v638, 1.442695
        %v655 = vpow.pop %v654
        %v656 = vmul.f32 %v639, 1.442695
        %v657 = vpow.pop %v656
        %v658 = vmul.f32 %v640, 1.442695
        %v659 = vpow.pop %v658
        %v660 = vmul.f32 %v641, 1.442695
        %v661 = vpow.pop %v660
        %v662 = vmul.f32 %v642, 1.442695
        %v663 = vpow.pop %v662
        %v664 = vmul.f32 %v643, 1.442695
        %v665 = vpow.pop %v664
        %v666 = vmul.f32 %v644, 1.442695
        %v667 = vpow.pop %v666
        %v668 = vmul.f32 %v645, 1.442695
        %v669 = vpow.pop %v668
        %v670 = vmul.f32 %v646, 1.442695
        %v671 = vpow.pop %v670
        %v672 = vmul.f32 %v647, 1.442695
        %v673 = vpow.pop %v672
        %v674 = vmul.f32 %v648, 1.442695
        %v675 = vpow.pop %v674
        %v676 = vmul.f32 %v649, 1.442695
        %v677 = vpow.pop %v676
        %v678 = vmul.f32 %v650, 1.442695
        %v679 = vpow.pop %v678
        %v680 = vmul.f32 %v651, 1.442695
        %v681 = vpow.pop %v680
        %v682 = vmul.f32 %v652, 1.442695
        %v683 = vpow.pop %v682
        %v684 = vmul.f32 %v653, 1.442695
        %v685 = vpow.pop %v684
        %v686 = vadd.f32 %v655, 1.0
        %v687 = vadd.f32 %v657, 1.0
        %v688 = vadd.f32 %v659, 1.0
        %v689 = vadd.f32 %v661, 1.0
        %v690 = vadd.f32 %v663, 1.0
        %v691 = vadd.f32 %v665, 1.0
        %v692 = vadd.f32 %v667, 1.0
        %v693 = vadd.f32 %v669, 1.0
        %v694 = vadd.f32 %v671, 1.0
        %v695 = vadd.f32 %v673, 1.0
        %v696 = vadd.f32 %v675, 1.0
        %v697 = vadd.f32 %v677, 1.0
        %v698 = vadd.f32 %v679, 1.0
        %v699 = vadd.f32 %v681, 1.0
        %v700 = vadd.f32 %v683, 1.0
        %v701 = vadd.f32 %v685, 1.0
        %v702 = vrcp.pop %v686
        %v703 = vmul.f32 1.0, %v702
        %v704 = vrcp.pop %v687
        %v705 = vmul.f32 1.0, %v704
        %v706 = vrcp.pop %v688
        %v707 = vmul.f32 1.0, %v706
        %v708 = vrcp.pop %v689
        %v709 = vmul.f32 1.0, %v708
        %v710 = vrcp.pop %v690
        %v711 = vmul.f32 1.0, %v710
        %v712 = vrcp.pop %v691
        %v713 = vmul.f32 1.0, %v712
        %v714 = vrcp.pop %v692
        %v715 = vmul.f32 1.0, %v714
        %v716 = vrcp.pop %v693
        %v717 = vmul.f32 1.0, %v716
        %v718 = vrcp.pop %v694
        %v719 = vmul.f32 1.0, %v718
        %v720 = vrcp.pop %v695
        %v721 = vmul.f32 1.0, %v720
        %v722 = vrcp.pop %v696
        %v723 = vmul.f32 1.0, %v722
        %v724 = vrcp.pop %v697
        %v725 = vmul.f32 1.0, %v724
        %v726 = vrcp.pop %v698
        %v727 = vmul.f32 1.0, %v726
        %v728 = vrcp.pop %v699
        %v729 = vmul.f32 1.0, %v728
        %v730 = vrcp.pop %v700
        %v731 = vmul.f32 1.0, %v730
        %v732 = vrcp.pop %v701
        %v733 = vmul.f32 1.0, %v732
        %735 = vset.pattern.permute.xlu0 0
        %736 = vperm.xlu0 %735, %v703
        %v737 = vpop.permute.xlu0 %736
        %740 = vset.pattern.permute.xlu0 0
        %741 = vperm.xlu0 %740, %v705
        %v742 = vpop.permute.xlu0 %741
        %745 = vset.pattern.permute.xlu0 0
        %746 = vperm.xlu0 %745, %v707
        %v747 = vpop.permute.xlu0 %746
        %750 = vset.pattern.permute.xlu0 0
        %751 = vperm.xlu0 %750, %v709
        %v752 = vpop.permute.xlu0 %751
        %755 = vset.pattern.permute.xlu0 0
        %756 = vperm.xlu0 %755, %v711
        %v757 = vpop.permute.xlu0 %756
        %760 = vset.pattern.permute.xlu0 0
        %761 = vperm.xlu0 %760, %v713
        %v762 = vpop.permute.xlu0 %761
        %765 = vset.pattern.permute.xlu0 0
        %766 = vperm.xlu0 %765, %v715
        %v767 = vpop.permute.xlu0 %766
        %770 = vset.pattern.permute.xlu0 0
        %771 = vperm.xlu0 %770, %v717
        %v772 = vpop.permute.xlu0 %771
        %775 = vset.pattern.permute.xlu0 0
        %776 = vperm.xlu0 %775, %v719
        %v777 = vpop.permute.xlu0 %776
        %780 = vset.pattern.permute.xlu0 0
        %781 = vperm.xlu0 %780, %v721
        %v782 = vpop.permute.xlu0 %781
        %785 = vset.pattern.permute.xlu0 0
        %786 = vperm.xlu0 %785, %v723
        %v787 = vpop.permute.xlu0 %786
        %790 = vset.pattern.permute.xlu0 0
        %791 = vperm.xlu0 %790, %v725
        %v792 = vpop.permute.xlu0 %791
        %795 = vset.pattern.permute.xlu0 0
        %796 = vperm.xlu0 %795, %v727
        %v797 = vpop.permute.xlu0 %796
        %800 = vset.pattern.permute.xlu0 0
        %801 = vperm.xlu0 %800, %v729
        %v802 = vpop.permute.xlu0 %801
        %805 = vset.pattern.permute.xlu0 0
        %806 = vperm.xlu0 %805, %v731
        %v807 = vpop.permute.xlu0 %806
        %810 = vset.pattern.permute.xlu0 0
        %811 = vperm.xlu0 %810, %v733
        %v812 = vpop.permute.xlu0 %811
        %v814 = vmul.f32 %v243, %v737
        %v815 = vmul.f32 %v244, %v737
        %v816 = vmul.f32 %v245, %v742
        %v817 = vmul.f32 %v246, %v742
        %v818 = vmul.f32 %v247, %v747
        %v819 = vmul.f32 %v248, %v747
        %v820 = vmul.f32 %v249, %v752
        %v821 = vmul.f32 %v250, %v752
        %v822 = vmul.f32 %v251, %v757
        %v823 = vmul.f32 %v252, %v757
        %v824 = vmul.f32 %v253, %v762
        %v825 = vmul.f32 %v254, %v762
        %v826 = vmul.f32 %v255, %v767
        %v827 = vmul.f32 %v256, %v767
        %v828 = vmul.f32 %v257, %v772
        %v829 = vmul.f32 %v258, %v772
        %v830 = vmul.f32 %v259, %v777
        %v831 = vmul.f32 %v260, %v777
        %v832 = vmul.f32 %v261, %v782
        %v833 = vmul.f32 %v262, %v782
        %v834 = vmul.f32 %v263, %v787
        %v835 = vmul.f32 %v264, %v787
        %v836 = vmul.f32 %v265, %v792
        %v837 = vmul.f32 %v266, %v792
        %v838 = vmul.f32 %v267, %v797
        %v839 = vmul.f32 %v268, %v797
        %v840 = vmul.f32 %v269, %v802
        %v841 = vmul.f32 %v270, %v802
        %v842 = vmul.f32 %v271, %v807
        %v843 = vmul.f32 %v272, %v807
        %v844 = vmul.f32 %v273, %v812
        %v845 = vmul.f32 %v274, %v812
        %846 = vst [vmem:[%s242] sm:$0xff] %v814
        %847 = vst [vmem:[%s242 + $0x8] sm:$0xff] %v815
        %848 = vst [vmem:[%s242 + $0x10] sm:$0xff] %v816
        %849 = vst [vmem:[%s242 + $0x18] sm:$0xff] %v817
        %850 = vst [vmem:[%s242 + $0x20] sm:$0xff] %v818
        %851 = vst [vmem:[%s242 + $0x28] sm:$0xff] %v819
        %852 = vst [vmem:[%s242 + $0x30] sm:$0xff] %v820
        %853 = vst [vmem:[%s242 + $0x38] sm:$0xff] %v821
        %854 = vst [vmem:[%s242 + $0x40] sm:$0xff] %v822
        %855 = vst [vmem:[%s242 + $0x48] sm:$0xff] %v823
        %856 = vst [vmem:[%s242 + $0x50] sm:$0xff] %v824
        %857 = vst [vmem:[%s242 + $0x58] sm:$0xff] %v825
        %858 = vst [vmem:[%s242 + $0x60] sm:$0xff] %v826
        %859 = vst [vmem:[%s242 + $0x68] sm:$0xff] %v827
        %860 = vst [vmem:[%s242 + $0x70] sm:$0xff] %v828
        %861 = vst [vmem:[%s242 + $0x78] sm:$0xff] %v829
        %862 = vst [vmem:[%s242 + $0x80] sm:$0xff] %v830
        %863 = vst [vmem:[%s242 + $0x88] sm:$0xff] %v831
        %864 = vst [vmem:[%s242 + $0x90] sm:$0xff] %v832
        %865 = vst [vmem:[%s242 + $0x98] sm:$0xff] %v833
        %866 = vst [vmem:[%s242 + $0xa0] sm:$0xff] %v834
        %867 = vst [vmem:[%s242 + $0xa8] sm:$0xff] %v835
        %868 = vst [vmem:[%s242 + $0xb0] sm:$0xff] %v836
        %869 = vst [vmem:[%s242 + $0xb8] sm:$0xff] %v837
        %870 = vst [vmem:[%s242 + $0xc0] sm:$0xff] %v838
        %871 = vst [vmem:[%s242 + $0xc8] sm:$0xff] %v839
        %872 = vst [vmem:[%s242 + $0xd0] sm:$0xff] %v840
        %873 = vst [vmem:[%s242 + $0xd8] sm:$0xff] %v841
        %874 = vst [vmem:[%s242 + $0xe0] sm:$0xff] %v842
        %875 = vst [vmem:[%s242 + $0xe8] sm:$0xff] %v843
        %876 = vst [vmem:[%s242 + $0xf0] sm:$0xff] %v844
        %877 = vst [vmem:[%s242 + $0xf8] sm:$0xff] %v845
        %s878 = sand.u32 %s140, 1
        %s879 = scalar_lea.sflag [#allocation4], %s878
        %s880 = sand.u32 %s140, 1
        %s881 = smul.addr %s880, 256
        %s882 = scalar_lea.vmem [#allocation5], %s881
        // Predicated region
        $region45: #{tpu_custom_call.1} parent=39 // pred_check
          %p883 = pneg %p150
        $region46: #{tpu_custom_call.1} parent=39 // pred_check_branch
          %885 = sbr.rel (%p883) target = $region48
        $region47: #{tpu_custom_call.1} parent=39 // pred_region
          %s887 = ssub.s32 4096, 4096
          %888 = vsyncadd %s879, %s887
          %s889 = smul.addr %s22, 32
          %s890 = smul.addr %s889, 128
          %s891 = scalar_lea.hbm %s5, %s890
          %s892 = sshll.u32 %s882, 4
          %s893 = int_to_ptr.vmem [resolvable:$true] %s892
          %898 = dma.vmem_to_hbm [thread:$0]  %s893, 4096, %s891, %s879, 256, 256, 16
        $region48: #{tpu_custom_call.1} parent=39 // pred_fallthru
          _
      $region40: #{tpu_custom_call.1} parent=5 // pred_fallthru
        _
      %p899 = scmp.le.s32.totalorder 2, %s17
      // Predicated region
      $region49: #{tpu_custom_call.1} parent=5 // pred_check
        %p900 = pneg %p899
      $region50: #{tpu_custom_call.1} parent=5 // pred_check_branch
        %902 = sbr.rel (%p900) target = $region52
      $region51: #{tpu_custom_call.1} parent=5 // pred_region
        %s903 = ssub.s32 %s17, 2
        // Predicated region
        $region53: #{tpu_custom_call.1} parent=51 // pred_check
          %p904 = pneg %p156
        $region54: #{tpu_custom_call.1} parent=51 // pred_check_branch
          %906 = sbr.rel (%p904) target = $region56
        $region55: #{tpu_custom_call.1} parent=51 // pred_region
          %s907 = sand.u32 %s141, 1
          %s908 = scalar_lea.sflag [#allocation4], %s907
          %s909 = sand.u32 %s141, 1
          %s910 = smul.addr %s909, 256
          %s911 = scalar_lea.vmem [#allocation5], %s910
          %912 = dma.done %s908, 4096
        $region56: #{tpu_custom_call.1} parent=51 // pred_fallthru
          _
      $region52: #{tpu_custom_call.1} parent=5 // pred_fallthru
        _
    $region6: #{tpu_custom_call.1} parent=1 // loop_footer
      %s21 = sadd.s32 1, %s17
    $region7: #{tpu_custom_call.1} parent=1 // loop_footer_branch
      %16 = sbr.rel target = $region3
    $region8: #{tpu_custom_call.1} parent=1 // loop_exit
      _
    %913 = vsyncpa [#allocation3], 1
    %s914 = scalar_lea.sflag [#allocation3], 1
    %915 = vsyncpa %s914, 1
    %916 = vsyncpa [#allocation4], 1
    %s917 = scalar_lea.sflag [#allocation4], 1
    %918 = vsyncpa %s917, 1

</llo_original>
